<compile_context>
chip_gen: v7x
topology: tpu7x:2x2x1
jax: 0.10.0
libtpu: 0.0.40
codegen_flags: <defaults>
</compile_context>

<pallas_src>
import functools

import jax
import jax.numpy as jnp
from jax.experimental import pallas as pl
from jax.experimental.pallas import tpu as pltpu


# ---- activation implementations (elementwise, computed inside the kernel) ----
def _leaky_relu(v):
    return jnp.where(v >= 0, v, v * jnp.asarray(0.01, v.dtype))  # nn.LeakyReLU default


def _sigmoid(v):
    return jax.nn.sigmoid(v)


def _cos(v):
    return jnp.cos(v)


def _relu(v):
    return jnp.maximum(v, jnp.asarray(0, v.dtype))


def _identity(v):
    return v


ACTIVATION_DICT = {
    "LeakyReLU": _leaky_relu,
    "Sigmoid": _sigmoid,
    "Cos": _cos,
    "ReLu": _relu,
    "noChange": _identity,
}

_TRANSCENDENTAL = frozenset({"Sigmoid", "Cos"})


# ---- Pallas kernel ----
def _multi_activation_kernel(x_ref, o_ref, *, act_names):
    # x_ref: (1, s_blk, 128)     o_ref: (1, A, s_blk, 128)
    # Read the tile once; cheap activations stay in the native dtype (bf16 VPU
    # on v6e/v7x), only transcendentals upcast to f32 for accuracy.
    xv = x_ref[...]
    need_f32 = any(n in _TRANSCENDENTAL for n in act_names)
    xf = xv.astype(jnp.float32) if (need_f32 and xv.dtype != jnp.float32) else xv
    for i, name in enumerate(act_names):
        src = xf if name in _TRANSCENDENTAL else xv
        # A axis is outside the (sublane, lane) vreg tile -> free slice write,
        # and the (s_blk, 128) slab is fully dense -> unmasked stores.
        o_ref[:, i, :, :] = ACTIVATION_DICT[name](src).astype(o_ref.dtype)


# ---- tiling helpers ----
def _sublane_multiple(dtype):
    """Sublane packing multiple: 8 for 4-byte, 16 for 2-byte, 32 for 1-byte."""
    return max(8, 32 // jnp.dtype(dtype).itemsize)


def _choose_sublane_block(s, sub_mult, itemsize, num_act, n_batch):
    """Pick the sublane-block extent s_blk (divides s, multiple of sub_mult).

    Targets ~MB-scale input blocks so the ~0.35us/step grid overhead is
    amortized, while keeping the double-buffered (1 + A)-way VMEM footprint
    (~2*(1+A)*block_bytes) well inside every generation's VMEM (incl. v7x 64MiB).
    If blocks are large, trade down a bit to guarantee enough grid steps for
    DMA/compute overlap and megacore sharding.
    """
    vmem_budget = 40 << 20                      # conservative cross-gen budget
    max_block_bytes = min(2 << 20, vmem_budget // (2 * (1 + num_act)))
    row_bytes = 128 * itemsize

    divisors = [d for d in range(sub_mult, s + 1, sub_mult) if s % d == 0]
    fits = [d for d in divisors if d * row_bytes <= max_block_bytes]
    if not fits:
        fits = [divisors[0]]

    best = fits[-1]                             # largest block under the cap
    min_steps = 8
    floor_bytes = max(max_block_bytes // 4, sub_mult * row_bytes)
    if n_batch * (s // best) < min_steps:
        # Only shrink for pipelining if blocks stay reasonably large; a tiny
        # input is better served by a single big step.
        for d in reversed(fits):
            if n_batch * (s // d) >= min_steps and d * row_bytes >= floor_bytes:
                best = d
                break
    return best


# ---- public wrapper ----
def multi_activation(x, modules):
    """Pallas equivalent of MultiActivation(modules)(x) with x in NCHW."""
    n, c, h, w = x.shape
    a = len(modules)
    itemsize = jnp.dtype(x.dtype).itemsize
    sub_mult = _sublane_multiple(x.dtype)

    # Flatten (C, H, W) per sample and pad once so it tiles densely as
    # (S, 128) with S a multiple of the sublane packing.
    cl = c * h * w
    tile_elems = sub_mult * 128
    cl_pad = ((cl + tile_elems - 1) // tile_elems) * tile_elems

    x_flat = x.reshape(n, cl)
    if cl_pad != cl:
        x_flat = jnp.pad(x_flat, ((0, 0), (0, cl_pad - cl)))
    s = cl_pad // 128
    x3 = x_flat.reshape(n, s, 128)

    s_blk = _choose_sublane_block(s, sub_mult, itemsize, a, n)
    grid = (n, s // s_blk)

    kernel = functools.partial(_multi_activation_kernel, act_names=tuple(modules))

    # Advisory cost hint: purely HBM-bandwidth bound (1 read + A writes of |x|).
    n_trans = sum(1 for m in modules if m in _TRANSCENDENTAL)
    cost = pl.CostEstimate(
        flops=int(x.size) * a,
        transcendentals=int(x.size) * n_trans,
        bytes_accessed=int(x.size) * itemsize * (1 + a),
    )

    out4 = pl.pallas_call(
        kernel,
        out_shape=jax.ShapeDtypeStruct((n, a, s, 128), x.dtype),
        grid=grid,
        # Input tile: one sample, s_blk dense sublanes, full 128 lanes.
        in_specs=[pl.BlockSpec((1, s_blk, 128), lambda ni, j: (ni, j, 0))],
        # Output tile: same slab with the activation axis kept whole.
        out_specs=pl.BlockSpec((1, a, s_blk, 128), lambda ni, j: (ni, 0, j, 0)),
        compiler_params=pltpu.CompilerParams(
            dimension_semantics=("parallel", "parallel"),
            # Above the 16/32 MiB defaults, below v7x's 64 MiB physical VMEM.
            vmem_limit_bytes=48 * 1024 * 1024,
        ),
        cost_estimate=cost,
    )(x3)

    # (N, A, S, 128) -> (N, A, cl_pad) -> drop pad -> (N, A*C, H, W),
    # exactly torch.concat(xs, dim=1) ordering.
    out = out4.reshape(n, a, cl_pad)
    if cl_pad != cl:
        out = out[:, :, :cl]
    return out.reshape(n, a * c, h, w)


def _reference(x, modules):
    return jnp.concatenate([ACTIVATION_DICT[m](x) for m in modules], axis=1)


if __name__ == "__main__":
    key = jax.random.PRNGKey(0)
    # Small NCHW input, consistent with a conv-style feature map.
    x = jax.random.normal(key, (2, 4, 16, 16), dtype=jnp.float32)

    modules = ["LeakyReLU", "Sigmoid", "Cos", "ReLu", "noChange"]

    out = multi_activation(x, modules)
    out = jax.block_until_ready(out)

    expected = _reference(x, modules)
    assert out.shape == (2, 4 * len(modules), 16, 16), out.shape
    # Slightly loose tolerance: TPU transcendental approximations (sigmoid/cos).
    assert jnp.allclose(out, expected, atol=1e-5, rtol=1e-5), "mismatch vs reference"

    print("KERNEL_OK")
</pallas_src>

<mosaic_0001>
module attributes {stable_mosaic.version = 11 : i64} {
  func.func @_multi_activation_kernel(%arg0: i32, %arg1: i32, %arg2: memref<1x8x128xf32, #tpu.memory_space<vmem>>, %arg3: memref<1x5x8x128xf32, #tpu.memory_space<vmem>>) attributes {dimension_semantics = [#tpu.dimension_semantics<parallel>, #tpu.dimension_semantics<parallel>], iteration_bounds = array<i64: 2, 1>, scalar_prefetch = 0 : i64, scratch_operands = 0 : i64, tpu.core_type = #tpu.core_type<tc>, window_params = [{transform_indices = @transform_0, window_bounds = array<i64: 1, 8, 128>}, {transform_indices = @transform_1, window_bounds = array<i64: 1, 5, 8, 128>}]} {
    %c0 = arith.constant 0 : index
    %c0_0 = arith.constant 0 : index
    %c0_1 = arith.constant 0 : index
    %0 = vector.load %arg2[%c0, %c0_0, %c0_1] : memref<1x8x128xf32, #tpu.memory_space<vmem>>, vector<1x8x128xf32>
    %cst = arith.constant 0.000000e+00 : f32
    %1 = vector.broadcast %cst : f32 to vector<1x8x128xf32>
    %2 = arith.cmpf oge, %0, %1 : vector<1x8x128xf32>
    %cst_2 = arith.constant 0.00999999977 : f32
    %3 = vector.broadcast %cst_2 : f32 to vector<1x8x128xf32>
    %4 = arith.mulf %0, %3 : vector<1x8x128xf32>
    %5 = arith.select %2, %0, %4 : vector<1x8x128xi1>, vector<1x8x128xf32>
    %c0_3 = arith.constant 0 : index
    %c0_4 = arith.constant 0 : index
    %c0_5 = arith.constant 0 : index
    %c0_6 = arith.constant 0 : index
    %6 = vector.load %arg3[%c0_3, %c0_4, %c0_5, %c0_6] : memref<1x5x8x128xf32, #tpu.memory_space<vmem>>, vector<1x1x8x128xf32>
    %7 = vector.shape_cast %6 : vector<1x1x8x128xf32> to vector<1x8x128xf32>
    %8 = vector.shape_cast %5 : vector<1x8x128xf32> to vector<1x1x8x128xf32>
    tpu.vector_store %arg3[%c0_3, %c0_4, %c0_5, %c0_6], %8 {strides = array<i32>} : memref<1x5x8x128xf32, #tpu.memory_space<vmem>>, vector<1x1x8x128xf32>,
    %9 = arith.negf %0 : vector<1x8x128xf32>
    %10 = math.exp %9 : vector<1x8x128xf32>
    %cst_7 = arith.constant 1.000000e+00 : f32
    %11 = vector.broadcast %cst_7 : f32 to vector<1x8x128xf32>
    %12 = arith.addf %11, %10 : vector<1x8x128xf32>
    %13 = arith.divf %11, %12 : vector<1x8x128xf32>
    %c0_8 = arith.constant 0 : index
    %c1 = arith.constant 1 : index
    %c0_9 = arith.constant 0 : index
    %c0_10 = arith.constant 0 : index
    %14 = vector.load %arg3[%c0_8, %c1, %c0_9, %c0_10] : memref<1x5x8x128xf32, #tpu.memory_space<vmem>>, vector<1x1x8x128xf32>
    %15 = vector.shape_cast %14 : vector<1x1x8x128xf32> to vector<1x8x128xf32>
    %16 = vector.shape_cast %13 : vector<1x8x128xf32> to vector<1x1x8x128xf32>
    tpu.vector_store %arg3[%c0_8, %c1, %c0_9, %c0_10], %16 {strides = array<i32>} : memref<1x5x8x128xf32, #tpu.memory_space<vmem>>, vector<1x1x8x128xf32>,
    %17 = math.cos %0 : vector<1x8x128xf32>
    %c0_11 = arith.constant 0 : index
    %c2 = arith.constant 2 : index
    %c0_12 = arith.constant 0 : index
    %c0_13 = arith.constant 0 : index
    %18 = vector.load %arg3[%c0_11, %c2, %c0_12, %c0_13] : memref<1x5x8x128xf32, #tpu.memory_space<vmem>>, vector<1x1x8x128xf32>
    %19 = vector.shape_cast %18 : vector<1x1x8x128xf32> to vector<1x8x128xf32>
    %20 = vector.shape_cast %17 : vector<1x8x128xf32> to vector<1x1x8x128xf32>
    tpu.vector_store %arg3[%c0_11, %c2, %c0_12, %c0_13], %20 {strides = array<i32>} : memref<1x5x8x128xf32, #tpu.memory_space<vmem>>, vector<1x1x8x128xf32>,
    %cst_14 = arith.constant 0.000000e+00 : f32
    %21 = vector.broadcast %cst_14 : f32 to vector<1x8x128xf32>
    %22 = arith.maximumf %0, %21 : vector<1x8x128xf32>
    %c0_15 = arith.constant 0 : index
    %c3 = arith.constant 3 : index
    %c0_16 = arith.constant 0 : index
    %c0_17 = arith.constant 0 : index
    %23 = vector.load %arg3[%c0_15, %c3, %c0_16, %c0_17] : memref<1x5x8x128xf32, #tpu.memory_space<vmem>>, vector<1x1x8x128xf32>
    %24 = vector.shape_cast %23 : vector<1x1x8x128xf32> to vector<1x8x128xf32>
    %25 = vector.shape_cast %22 : vector<1x8x128xf32> to vector<1x1x8x128xf32>
    tpu.vector_store %arg3[%c0_15, %c3, %c0_16, %c0_17], %25 {strides = array<i32>} : memref<1x5x8x128xf32, #tpu.memory_space<vmem>>, vector<1x1x8x128xf32>,
    %c0_18 = arith.constant 0 : index
    %c4 = arith.constant 4 : index
    %c0_19 = arith.constant 0 : index
    %c0_20 = arith.constant 0 : index
    %26 = vector.load %arg3[%c0_18, %c4, %c0_19, %c0_20] : memref<1x5x8x128xf32, #tpu.memory_space<vmem>>, vector<1x1x8x128xf32>
    %27 = vector.shape_cast %26 : vector<1x1x8x128xf32> to vector<1x8x128xf32>
    %28 = vector.shape_cast %0 : vector<1x8x128xf32> to vector<1x1x8x128xf32>
    tpu.vector_store %arg3[%c0_18, %c4, %c0_19, %c0_20], %28 {strides = array<i32>} : memref<1x5x8x128xf32, #tpu.memory_space<vmem>>, vector<1x1x8x128xf32>,
    return
  }
  func.func @transform_0(%arg0: i32, %arg1: i32) -> (i32, i32, i32) {
    %c0_i32 = arith.constant 0 : i32
    %c0_i32_0 = arith.constant 0 : i32
    return %arg0, %arg1, %c0_i32 : i32, i32, i32
  }
  func.func @transform_1(%arg0: i32, %arg1: i32) -> (i32, i32, i32, i32) {
    %c0_i32 = arith.constant 0 : i32
    %c0_i32_0 = arith.constant 0 : i32
    %c0_i32_1 = arith.constant 0 : i32
    return %arg0, %c0_i32, %arg1, %c0_i32_0 : i32, i32, i32, i32
  }
}

</mosaic_0001>

<llo_original>
// kernel: tpu_custom_call.1
$region0: #{tpu_custom_call.1}
  #allocation0 [shape = 'u32[]', space=smem, size = 0x4, offset = 0x4, fixed_abs, tag = 'smem constant byte address 0x4 - core index']
  #allocation1 [shape = 'u32[144,128]{1,0:T(1,128)}', space=vmem, size = 0x12000, scoped, tag = 'internal scratch']
  %s0 = inlined_call_operand.hbm [shape: f32[2,8,128], index: 0, kind: input, shape index: {}]
  %s1 = inlined_call_operand.hbm [shape: f32[2,5,8,128], index: 1, kind: output, shape index: {}]
  %s2 = sld [smem:[#allocation0]]
  $region41: #{tpu_custom_call.1} parent=0
    _
  %s4 = ssub.s32 1, %s2
  %s5 = scalar_select 0, %s4, %s2
  $region1: #{tpu_custom_call.1} parent=0
    #allocation2 [shape = 'u8[8192]{0}', space=vmem, size = 0x2000, scoped, tag = 'input window, operand 0']
    #allocation3 [shape = 's32[2]{0}', space=sflag, size = 0x8, scoped, tag = 'scoped memory for tpu_custom_call.1']
    #allocation4 [shape = 's32[2]{0}', space=sflag, size = 0x8, scoped, tag = 'scoped memory for tpu_custom_call.1']
    #allocation5 [shape = 'u8[40960]{0}', space=vmem, size = 0xa000, scoped, tag = 'output window, operand 0']
    %6 = vsyncpa [#allocation3], 0
    %s7 = scalar_lea.sflag [#allocation3], 1
    %8 = vsyncpa %s7, 0
    %9 = vsyncpa [#allocation4], 0
    %s10 = scalar_lea.sflag [#allocation4], 1
    %11 = vsyncpa %s10, 0
    loop: start=0, step=1, limit=4
    $region2: #{tpu_custom_call.1} parent=1 // loop_pre_header
      _
    $region3: #{tpu_custom_call.1} parent=1 // loop_header
      %s13 = sphi 0, %s17
      %p14 = scmp.ge.s32.totalorder %s13, 4
      %s20 = sphi 0, %s32
      %s21 = sphi 0, %s28
      %s22 = sphi 0, %s20
      %s23 = sphi 0, %s21
      %s24 = sphi 0, %s22
      %s25 = sphi 0, %s23
      %s37 = sphi 0, %s39
      %s40 = sphi 0, %s37
      %s41 = sphi 0, %s40
      %s57 = sphi 0, %s41
      %s65 = sphi 0, %s67
      %s68 = sphi 0, %s65
      %s69 = sphi 0, %s68
      %s85 = sphi 0, %s69
    $region4: #{tpu_custom_call.1} parent=1 // loop_header_branch
      %16 = sbr.rel (%p14) target = $region8
    $region5: #{tpu_custom_call.1} parent=1 // loop_body
      %s18 = ssub.s32 %s13, 1
      %s19 = ssub.s32 %s13, 2
      %s26 = sadd.s32 1, %s21
      %p27 = scmp.ge.s32.totalorder %s26, 1
      %s28 = scalar_select %p27, 0, %s26
      %s29 = sadd.s32 1, %s20
      %s30 = scalar_select %p27, %s29, %s20
      %p31 = scmp.ge.s32.totalorder %s30, 2
      %s32 = scalar_select %p31, 0, %s30
      %s33 = ssub.s32 %s20, %s32
      %s34 = ssub.s32 %s21, %s28
      %s35 = sor.u32 %s33, %s34
      %p36 = scmp.eq.s32.totalorder %s35, 0
      %s38 = sadd.s32 %s37, 1
      %s39 = scalar_select %p36, %s37, %s38
      %p42 = pneg %p36
      %p43 = scmp.eq.s32.totalorder %s13, 1
      %p44 = por %p42, %p43
      %p45 = scmp.ne.s32.totalorder %s37, %s40
      %p46 = scmp.eq.s32.totalorder %s13, 0
      %p47 = por %p45, %p46
      %p48 = scmp.ne.s32.totalorder %s37, %s40
      %p49 = scmp.eq.s32.totalorder %s18, 1
      %p50 = por %p48, %p49
      %p51 = scmp.ne.s32.totalorder %s40, %s41
      %p52 = scmp.eq.s32.totalorder %s18, 0
      %p53 = por %p51, %p52
      %p54 = scmp.ne.s32.totalorder %s40, %s41
      %p55 = scmp.eq.s32.totalorder %s19, 1
      %p56 = por %p54, %p55
      %p58 = scmp.ne.s32.totalorder %s41, %s57
      %p59 = scmp.eq.s32.totalorder %s19, 0
      %p60 = por %p58, %p59
      %s61 = ssub.s32 %s20, %s32
      %s62 = ssub.s32 %s21, %s28
      %s63 = sor.u32 %s61, %s62
      %p64 = scmp.eq.s32.totalorder %s63, 0
      %s66 = sadd.s32 %s65, 1
      %s67 = scalar_select %p64, %s65, %s66
      %p70 = pneg %p64
      %p71 = scmp.eq.s32.totalorder %s13, 1
      %p72 = por %p70, %p71
      %p73 = scmp.ne.s32.totalorder %s65, %s68
      %p74 = scmp.eq.s32.totalorder %s13, 0
      %p75 = por %p73, %p74
      %p76 = scmp.ne.s32.totalorder %s65, %s68
      %p77 = scmp.eq.s32.totalorder %s18, 1
      %p78 = por %p76, %p77
      %p79 = scmp.ne.s32.totalorder %s68, %s69
      %p80 = scmp.eq.s32.totalorder %s18, 0
      %p81 = por %p79, %p80
      %p82 = scmp.ne.s32.totalorder %s68, %s69
      %p83 = scmp.eq.s32.totalorder %s19, 1
      %p84 = por %p82, %p83
      %p86 = scmp.ne.s32.totalorder %s69, %s85
      %p87 = scmp.eq.s32.totalorder %s19, 0
      %p88 = por %p86, %p87
      %p89 = scmp.le.s32.totalorder 1, %s13
      %p90 = scmp.lt.s32.totalorder %s13, 3
      %p91 = pnand %p89, %p90
      %p92 = pneg %p91
      // Predicated region
      $region9: #{tpu_custom_call.1} parent=5 // pred_check
        _
      $region10: #{tpu_custom_call.1} parent=5 // pred_check_branch
        %94 = sbr.rel (%p91) target = $region12
      $region11: #{tpu_custom_call.1} parent=5 // pred_region
        %s95 = ssub.s32 %s13, 1
      $region12: #{tpu_custom_call.1} parent=5 // pred_fallthru
        _
      %p96 = scmp.lt.s32.totalorder %s13, 2
      // Predicated region
      $region13: #{tpu_custom_call.1} parent=5 // pred_check
        %p97 = pneg %p96
      $region14: #{tpu_custom_call.1} parent=5 // pred_check_branch
        %99 = sbr.rel (%p97) target = $region16
      $region15: #{tpu_custom_call.1} parent=5 // pred_region
        // Predicated region
        $region17: #{tpu_custom_call.1} parent=15 // pred_check
          %p100 = pneg %p47
        $region18: #{tpu_custom_call.1} parent=15 // pred_check_branch
          %102 = sbr.rel (%p100) target = $region20
        $region19: #{tpu_custom_call.1} parent=15 // pred_region
          %s103 = sand.u32 %s37, 1
          %s104 = scalar_lea.sflag [#allocation3], %s103
          %s105 = sand.u32 %s37, 1
          %s106 = smul.addr %s105, 8
          %s107 = scalar_lea.vmem [#allocation2], %s106
          %s109 = ssub.s32 128, 128
          %110 = vsyncadd %s104, %s109
          %s111 = sadd.s32 %s21, %s20
          %s112 = smul.addr %s111, 128
          %s113 = scalar_lea.hbm %s0, %s112
          %s115 = sshll.u32 %s107, 4
          %s116 = int_to_ptr.vmem [resolvable:$true] %s115
          %118 = dma.hbm_to_vmem [thread:$0]  %s113, 128, %s116, %s104
        $region20: #{tpu_custom_call.1} parent=15 // pred_fallthru
          _
      $region16: #{tpu_custom_call.1} parent=5 // pred_fallthru
        _
      %p119 = scmp.le.s32.totalorder 1, %s13
      %p120 = scmp.lt.s32.totalorder %s13, 3
      %p121 = pnand %p119, %p120
      %p122 = pneg %p121
      // Predicated region
      $region21: #{tpu_custom_call.1} parent=5 // pred_check
        _
      $region22: #{tpu_custom_call.1} parent=5 // pred_check_branch
        %124 = sbr.rel (%p121) target = $region24
      $region23: #{tpu_custom_call.1} parent=5 // pred_region
        %s125 = ssub.s32 %s13, 1
        %s126 = sand.u32 %s40, 1
        %s127 = scalar_lea.sflag [#allocation3], %s126
        %s128 = sand.u32 %s40, 1
        %s129 = smul.addr %s128, 8
        %s130 = scalar_lea.vmem [#allocation2], %s129
        // Predicated region
        $region25: #{tpu_custom_call.1} parent=23 // pred_check
          %p131 = pneg %p53
        $region26: #{tpu_custom_call.1} parent=23 // pred_check_branch
          %133 = sbr.rel (%p131) target = $region28
        $region27: #{tpu_custom_call.1} parent=23 // pred_region
          %134 = dma.done %s127, 128
        $region28: #{tpu_custom_call.1} parent=23 // pred_fallthru
          _
        %s135 = sand.u32 %s40, 1
        %s136 = scalar_lea.sflag [#allocation3], %s135
        %s137 = sand.u32 %s40, 1
        %s138 = smul.addr %s137, 8
        %s139 = scalar_lea.vmem [#allocation2], %s138
        %p140 = pneg %p53
        %p141 = pneg %p50
        %p142 = pneg %p81
        %p143 = pneg %p78
        %s144 = sand.u32 %s68, 1
        %s145 = scalar_lea.sflag [#allocation4], %s144
        %s146 = sand.u32 %s68, 1
        %s147 = smul.addr %s146, 40
        %s148 = scalar_lea.vmem [#allocation5], %s147
        %v149 = vld [vmem:[%s130] sm:$0xff]
        %vm150 = vcmp.ge.f32.partialorder %v149, 0.0
        %v151 = vmul.f32 %v149, 0.01
        %v152 = vsel %vm150, %v149, %v151
        %153 = vst [vmem:[%s148] sm:$0xff] %v152
        %v154 = vxor.u32 %v149, 2147483648
        %v155 = vmul.f32 %v154, 1.442695
        %v156 = vpow.pop %v155
        %v157 = vadd.f32 %v156, 1.0
        %v158 = vrcp.pop %v157
        %v159 = vmul.f32 1.0, %v158
        %s160 = scalar_lea.vmem %s148, 8 [#allocation5]
        %161 = vst [vmem:[%s160] sm:$0xff] %v159
        %v162 = vand.u32 2147483647, %v149
        %vm163 = vcmp.le.f32.partialorder %v162, 0.7853982
        %vm164 = vcmp.lt.s32.totalorder %v149, 0
        %v165 = vand.u32 %v149, 2139095040
        %v166 = vshrl.u32 %v165, 23
        %v167 = vsub.s32 %v166, 127
        %v168 = vand.u32 2147483647, %v149
        %v169 = vand.u32 %v168, 8388607
        %v170 = vor.u32 %v169, 8388608
        %v171 = vsub.s32 0, %v170
        %v172 = vadd.s32 %v167, 1
        %vm173 = vcmp.gt.s32.totalorder %v172, 0
        %v174 = vsel %vm173, %v172, 0
        %v175 = vshrl.u32 %v174, 5
        %v176 = vand.u32 %v174, 31
        %v177 = vsub.s32 32, %v176
        %v178 = vshrl.u32 683565275, %v177
        %v179 = vshll.u32 683565275, %v176
        %v180 = vshrl.u32 2475754826, %v177
        %v181 = vor.u32 %v179, %v180
        %v182 = vshll.u32 2475754826, %v176
        %v183 = vshrl.u32 2131351028, %v177
        %v184 = vor.u32 %v182, %v183
        %v185 = vshll.u32 2131351028, %v176
        %v186 = vshrl.u32 2102212464, %v177
        %v187 = vor.u32 %v185, %v186
        %v188 = vshll.u32 2102212464, %v176
        %v189 = vshrl.u32 920167782, %v177
        %v190 = vor.u32 %v188, %v189
        %v191 = vshll.u32 920167782, %v176
        %v192 = vshrl.u32 1326507024, %v177
        %v193 = vor.u32 %v191, %v192
        %vm194 = vcmp.lt.s32.totalorder %v175, 1
        %vm195 = vcmp.lt.s32.totalorder %v175, 2
        %vm196 = vcmp.lt.s32.totalorder %v175, 3
        %vm197 = vcmp.lt.s32.totalorder %v175, 4
        %v198 = vsel %vm194, %v178, %v181
        %v199 = vsel %vm197, %v187, 2102212464
        %v200 = vsel %vm196, %v184, %v199
        %v201 = vsel %vm195, %v198, %v200
        %v202 = vsel %vm194, %v181, %v184
        %v203 = vsel %vm197, %v190, 920167782
        %v204 = vsel %vm196, %v187, %v203
        %v205 = vsel %vm195, %v202, %v204
        %v206 = vsel %vm194, %v184, %v187
        %v207 = vsel %vm197, %v193, 1326507024
        %v208 = vsel %vm196, %v190, %v207
        %v209 = vsel %vm195, %v206, %v208
        %v210 = vshll.u32 %v170, 8
        %v211 = vmul.u32.u64.compose %v210, %v209
        %v212 = vextract.low.u32 %v211
        %v213 = vextract.high.u32 %v211
        %v214 = vmul.u32.u64.compose %v210, %v205
        %v215 = vextract.low.u32 %v214
        %v216 = vextract.high.u32 %v214
        %v217 = vmul.u32 %v210, %v201
        %v218 = vadd.s32 %v213, %v215
        %vm219 = vc.u32 %v213, %v215
        %v220 = vadd.s32 %v216, 1
        %v221 = vsel %vm219, %v220, %v216
        %v222 = vadd.s32 %v217, %v221
        %v223 = vadd.s32 %v222, 536870912
        %v224 = vshrl.u32 %v223, 30
        %v225 = vshll.u32 %v224, 30
        %v226 = vsub.s32 %v222, %v225
        %vm227 = vcmp.lt.s32.totalorder %v226, 0
        %v228 = vsub.s32 0, %v226
        %v229 = vsel %vm227, %v228, %v226
        %v230 = vclz %v229
        %v231 = vsub.s32 %v230, 2
        %vm232 = vcmp.gt.s32.totalorder 0, %v231
        %v233 = vsel %vm232, 0, %v231
        %v234 = vsub.s32 32, %v233
        %v235 = vshll.u32 %v226, %v233
        %v236 = vshrl.u32 %v218, %v234
        %v237 = vor.u32 %v235, %v236
        %v238 = vsub.s32 4294967266, %v233
        %v239 = vadd.s32 %v238, 127
        %v240 = vshll.u32 %v239, 23
        %v241 = vor.u32 4788187, %v240
        %v242 = vand.u32 2147483647, %v241
        %v244 = vcvt.s32.f32 %v237
        %v245 = vmul.f32 %v244, %v242
        %v246 = vxor.u32 %v245, 2147483648
        %v247 = vsel %vm164, %v246, %v245
        %v248 = vsub.s32 4, %v224
        %v249 = vsel %vm164, %v248, %v224
        %v250 = vsel %vm163, %v149, %v247
        %v251 = vsel %vm163, 0, %v249
        %v252 = vcosq.f32.pop %v250
        %v253 = vsinq.f32.pop %v250
        %vm254 = vweird.f32 %v149
        %v255 = vand.u32 %v251, 3
        %vm256 = vcmp.lt.s32.totalorder %v255, 2
        %vm257 = vcmp.eq.s32.totalorder %v255, 0
        %v258 = vxor.u32 %v253, 2147483648
        %v259 = vsel %vm257, %v252, %v258
        %vm260 = vcmp.eq.s32.totalorder %v255, 2
        %v261 = vxor.u32 %v252, 2147483648
        %v262 = vsel %vm260, %v261, %v253
        %v263 = vsel %vm256, %v259, %v262
        %v264 = vsel %vm254, nan, %v263
        %s265 = scalar_lea.vmem %s148, 16 [#allocation5]
        %266 = vst [vmem:[%s265] sm:$0xff] %v264
        %v267 = vmax.f32 %v149, 0.0
        %s268 = scalar_lea.vmem %s148, 24 [#allocation5]
        %269 = vst [vmem:[%s268] sm:$0xff] %v267
        %s270 = scalar_lea.vmem %s148, 32 [#allocation5]
        %271 = vst [vmem:[%s270] sm:$0xff] %v149
        %s272 = sand.u32 %s68, 1
        %s273 = scalar_lea.sflag [#allocation4], %s272
        %s274 = sand.u32 %s68, 1
        %s275 = smul.addr %s274, 40
        %s276 = scalar_lea.vmem [#allocation5], %s275
        // Predicated region
        $region29: #{tpu_custom_call.1} parent=23 // pred_check
          %p277 = pneg %p78
        $region30: #{tpu_custom_call.1} parent=23 // pred_check_branch
          %279 = sbr.rel (%p277) target = $region32
        $region31: #{tpu_custom_call.1} parent=23 // pred_region
          %s281 = ssub.s32 640, 640
          %282 = vsyncadd %s273, %s281
          %s283 = smul.addr %s22, 5
          %s284 = sadd.s32 %s23, %s283
          %s285 = smul.addr %s284, 128
          %s286 = scalar_lea.hbm %s1, %s285
          %s287 = sshll.u32 %s276, 4
          %s288 = int_to_ptr.vmem [resolvable:$true] %s287
          %293 = dma.vmem_to_hbm [thread:$0]  %s288, 640, %s286, %s273, 128, 128, 8
        $region32: #{tpu_custom_call.1} parent=23 // pred_fallthru
          _
      $region24: #{tpu_custom_call.1} parent=5 // pred_fallthru
        _
      %p294 = scmp.le.s32.totalorder 2, %s13
      // Predicated region
      $region33: #{tpu_custom_call.1} parent=5 // pred_check
        %p295 = pneg %p294
      $region34: #{tpu_custom_call.1} parent=5 // pred_check_branch
        %297 = sbr.rel (%p295) target = $region36
      $region35: #{tpu_custom_call.1} parent=5 // pred_region
        %s298 = ssub.s32 %s13, 2
        // Predicated region
        $region37: #{tpu_custom_call.1} parent=35 // pred_check
          %p299 = pneg %p84
        $region38: #{tpu_custom_call.1} parent=35 // pred_check_branch
          %301 = sbr.rel (%p299) target = $region40
        $region39: #{tpu_custom_call.1} parent=35 // pred_region
          %s302 = sand.u32 %s69, 1
          %s303 = scalar_lea.sflag [#allocation4], %s302
          %s304 = sand.u32 %s69, 1
          %s305 = smul.addr %s304, 40
          %s306 = scalar_lea.vmem [#allocation5], %s305
          %307 = dma.done %s303, 640
        $region40: #{tpu_custom_call.1} parent=35 // pred_fallthru
          _
      $region36: #{tpu_custom_call.1} parent=5 // pred_fallthru
        _
    $region6: #{tpu_custom_call.1} parent=1 // loop_footer
      %s17 = sadd.s32 1, %s13
    $region7: #{tpu_custom_call.1} parent=1 // loop_footer_branch
      %12 = sbr.rel target = $region3
    $region8: #{tpu_custom_call.1} parent=1 // loop_exit
      _
    %308 = vsyncpa [#allocation3], 1
    %s309 = scalar_lea.sflag [#allocation3], 1
    %310 = vsyncpa %s309, 1
    %311 = vsyncpa [#allocation4], 1
    %s312 = scalar_lea.sflag [#allocation4], 1
    %313 = vsyncpa %s312, 1

</llo_original>
